<compile_context>
chip_gen: v7x
topology: tpu7x:2x2x1
jax: 0.10.0
libtpu: 0.0.40
codegen_flags: <defaults>
</compile_context>

<pallas_src>
import functools

import jax
import jax.numpy as jnp
from jax import lax
from jax.experimental import pallas as pl
from jax.experimental.pallas import tpu as pltpu


def _round_up(x, m):
    return ((x + m - 1) // m) * m


# --------------------------------------------------------------------------
# Pass 1: normalize centers once + cluster-variance regularizer (weights only)
# --------------------------------------------------------------------------
def _prep_centers_kernel(w_ref, wn_ref, reg_ref, *, C, Cpad, K, use_reg):
    w = w_ref[...]                                            # [K*Cpad, D] f32 (k-major)
    ss = jnp.sum(w * w, axis=-1, keepdims=True)               # [K*Cpad, 1]
    inv = lax.rsqrt(jnp.maximum(ss, jnp.float32(1e-24)))      # == 1 / max(||w||, 1e-12)
    wn = w * inv                                              # F.normalize(w), f32
    wn_ref[...] = wn.astype(jnp.bfloat16)                     # bf16 copy for the MXU

    # NOTE: the per-class center gram is kept elementwise (runs once per call);
    # an MXU version would need a diagonal extraction that costs more XLU work
    # than it saves at realistic K.
    if use_reg and K > 1:
        valid = lax.broadcasted_iota(jnp.int32, (Cpad, 1), 0) < C   # mask padded classes
        tot = jnp.float32(0.0)
        for k1 in range(K):
            wk1 = wn[k1 * Cpad:(k1 + 1) * Cpad]               # [Cpad, D]
            for k2 in range(k1 + 1, K):                       # strict upper triangle
                wk2 = wn[k2 * Cpad:(k2 + 1) * Cpad]
                g = jnp.sum(wk1 * wk2, axis=-1, keepdims=True)        # [Cpad, 1]
                sub = 1.0 - g
                sub = jnp.where(sub <= 0.0, jnp.float32(1e-10), sub)  # torch clamp
                tot = tot + jnp.sum(jnp.where(valid, jnp.sqrt(2.0 * sub), 0.0))
        reg_ref[0, 0] = tot / (C * K * (K - 1))
    else:
        reg_ref[0, 0] = jnp.float32(0.0)


# --------------------------------------------------------------------------
# Pass 2: batch-tiled classifier loss (one fused bf16 MXU matmul per tile)
# --------------------------------------------------------------------------
def _soft_triple_tile_kernel(emb_ref, wn_ref, lab_ref, out_ref, *,
                             N, C, Cpad, K, delta, gamma_inv, lam):
    emb = emb_ref[...]                                        # [TILE_N, D] bf16
    wn = wn_ref[...]                                          # [K*Cpad, D] bf16 (resident)
    TILE_N = emb.shape[0]

    # single fused lane-dense MXU matmul, f32 accumulation
    s = lax.dot_general(emb, wn, (((1,), (1,)), ((), ())),
                        preferred_element_type=jnp.float32)   # [TILE_N, K*Cpad]

    # per-class softmax over the K centers: the K class blocks are contiguous,
    # 128-lane-aligned slices of the already-materialized slab.
    m = s[:, 0:Cpad]
    for k in range(1, K):
        m = jnp.maximum(m, s[:, k * Cpad:(k + 1) * Cpad])
    z = jnp.zeros((TILE_N, Cpad), jnp.float32)
    hsum = jnp.zeros((TILE_N, Cpad), jnp.float32)
    for k in range(K):
        sk = s[:, k * Cpad:(k + 1) * Cpad]
        e = jnp.exp(gamma_inv * (sk - m))
        z = z + e
        hsum = hsum + e * sk
    h = hsum * pl.reciprocal(z, approx=True)                  # 1/z on the EUP

    labels = lab_ref[...]                                     # [TILE_N, 1] int32
    col = lax.broadcasted_iota(jnp.int32, (TILE_N, Cpad), 1)
    is_true = col == labels                                   # one-hot as a boolean mask
    class_ok = col < C                                        # exclude padded classes

    hm = lam * jnp.where(is_true, h - delta, h)               # margin via select
    hm_valid = jnp.where(class_ok, hm, -jnp.inf)

    hmax = jnp.max(hm_valid, axis=1, keepdims=True)
    lse = jnp.log(jnp.sum(jnp.exp(hm_valid - hmax), axis=1, keepdims=True)) + hmax
    picked = jnp.sum(jnp.where(is_true, hm, 0.0), axis=1, keepdims=True)

    row = lax.broadcasted_iota(jnp.int32, (TILE_N, 1), 0) + pl.program_id(0) * TILE_N
    ce = jnp.where(row < N, lse - picked, 0.0)                # mask padded batch rows
    partial = jnp.sum(ce) * (1.0 / N)                         # per-tile share of the mean

    # lane-dense (8, 128) partial-loss store: scalar at [0, 0], zeros elsewhere
    r8 = lax.broadcasted_iota(jnp.int32, (8, 128), 0)
    l128 = lax.broadcasted_iota(jnp.int32, (8, 128), 1)
    out_ref[0] = jnp.where((r8 == 0) & (l128 == 0), partial, 0.0)


# --------------------------------------------------------------------------
# Wrapper (layout glue + final scalar combine only)
# --------------------------------------------------------------------------
def soft_triple_loss(embeddings, weight, labels, *,
                     num_categories, num_initial_center,
                     use_regularizer=True, similarity_margin=0.1,
                     coef_regularizer1=0.01, coef_regularizer2=0.01,
                     coef_scale_softmax=1.0):
    N, D = embeddings.shape
    C, K = num_categories, num_initial_center
    assert weight.shape == (C * K, D)

    LANE = 128
    Cpad = _round_up(C, LANE)      # each class block is lane-aligned; with K>=2
                                   # the fused output width K*Cpad is a multiple of 256

    # glue: nn.Linear weight [C*K, D] -> k-major, class-padded [K*Cpad, D]
    # (row k*Cpad + c  ==  weight[c*K + k]; padded rows are zero)
    w3 = weight.astype(jnp.float32).reshape(C, K, D).transpose(1, 0, 2)   # [K, C, D]
    w3 = jnp.pad(w3, ((0, 0), (0, Cpad - C), (0, 0)))
    w_km = w3.reshape(K * Cpad, D)

    # explicit VMEM budget with headroom under v7x's 64 MiB/TC (also fine on v5e/v6e)
    vmem_limit = 48 * 1024 * 1024

    # ---- pass 1 (once): normalize centers, bf16 copy, weight-only regularizer
    prep = functools.partial(_prep_centers_kernel, C=C, Cpad=Cpad, K=K,
                             use_reg=bool(use_regularizer))
    wn_bf16, reg = pl.pallas_call(
        prep,
        out_shape=(jax.ShapeDtypeStruct((K * Cpad, D), jnp.bfloat16),
                   jax.ShapeDtypeStruct((1, 1), jnp.float32)),
        in_specs=[pl.BlockSpec(memory_space=pltpu.MemorySpace.VMEM)],
        out_specs=(pl.BlockSpec(memory_space=pltpu.MemorySpace.VMEM),
                   pl.BlockSpec(memory_space=pltpu.MemorySpace.SMEM)),
        compiler_params=pltpu.CompilerParams(vmem_limit_bytes=vmem_limit),
    )(w_km)

    # ---- pass 2: batch-tiled classifier loss --------------------------------
    TILE_N = min(128, _round_up(N, 8))     # N < 128 -> single full-extent tile
    Npad = _round_up(N, TILE_N)
    num_tiles = Npad // TILE_N

    emb_p = jnp.pad(embeddings.astype(jnp.float32),
                    ((0, Npad - N), (0, 0))).astype(jnp.bfloat16)
    lab_p = jnp.pad(labels.astype(jnp.int32).reshape(N, 1),
                    ((0, Npad - N), (0, 0)))

    kernel = functools.partial(
        _soft_triple_tile_kernel, N=N, C=C, Cpad=Cpad, K=K,
        delta=float(similarity_margin),
        gamma_inv=float(1.0 / coef_regularizer1),
        lam=float(coef_scale_softmax))

    partials = pl.pallas_call(
        kernel,
        out_shape=jax.ShapeDtypeStruct((num_tiles, 8, 128), jnp.float32),
        grid_spec=pltpu.PrefetchScalarGridSpec(
            num_scalar_prefetch=0,
            grid=(num_tiles,),
            in_specs=[pl.BlockSpec((TILE_N, D), lambda i: (i, 0)),
                      pl.BlockSpec((K * Cpad, D), lambda i: (0, 0)),  # resident weight
                      pl.BlockSpec((TILE_N, 1), lambda i: (i, 0))],
            out_specs=pl.BlockSpec((1, 8, 128), lambda i: (i, 0, 0)),
        ),
        compiler_params=pltpu.CompilerParams(
            dimension_semantics=("parallel",),   # shard batch tiles across TCs (v7x)
            vmem_limit_bytes=vmem_limit),
    )(emb_p, wn_bf16, lab_p)

    clf_loss = jnp.sum(partials)   # each tile partial already carries the 1/N factor
    if use_regularizer:
        return clf_loss + float(coef_regularizer2) * reg[0, 0]
    return clf_loss


if __name__ == "__main__":
    # small synthetic problem: batch=8, embedding_dim=32, categories=8, centers=2
    N, D, C, K = 8, 32, 8, 2

    key = jax.random.PRNGKey(0)
    k_emb, k_w, k_lab = jax.random.split(key, 3)

    embeddings = jax.random.normal(k_emb, (N, D), dtype=jnp.float32)

    # deterministic xavier_normal_ init for nn.Linear(D, C*K).weight  ([C*K, D])
    fan_in, fan_out = D, C * K
    std = (2.0 / (fan_in + fan_out)) ** 0.5
    weight = std * jax.random.normal(k_w, (C * K, D), dtype=jnp.float32)

    labels = jax.random.randint(k_lab, (N,), 0, C, dtype=jnp.int32)

    loss = soft_triple_loss(
        embeddings, weight, labels,
        num_categories=C, num_initial_center=K,
        use_regularizer=True, similarity_margin=0.1,
        coef_regularizer1=0.01, coef_regularizer2=0.01,
        coef_scale_softmax=1.0,
    )
    loss = jax.block_until_ready(loss)
    assert bool(jnp.isfinite(loss)), "loss is not finite"
    print("KERNEL_OK")
</pallas_src>

<mosaic_0001>
module attributes {stable_mosaic.version = 11 : i64} {
  func.func @_prep_centers_kernel(%arg0: memref<256x32xf32, #tpu.memory_space<vmem>>, %arg1: memref<256x32xbf16, #tpu.memory_space<vmem>>, %arg2: memref<1x1xf32, #tpu.memory_space<smem>>) attributes {dimension_semantics = [], scalar_prefetch = 0 : i64, scratch_operands = 0 : i64, tpu.core_type = #tpu.core_type<tc>} {
    %c0 = arith.constant 0 : index
    %c0_0 = arith.constant 0 : index
    %0 = vector.load %arg0[%c0, %c0_0] : memref<256x32xf32, #tpu.memory_space<vmem>>, vector<256x32xf32>
    %1 = arith.mulf %0, %0 : vector<256x32xf32>
    %cst = arith.constant dense<0.000000e+00> : vector<256xf32>
    %2 = vector.multi_reduction <add>, %1, %cst [1] : vector<256x32xf32> to vector<256xf32>
    %3 = vector.shape_cast %2 : vector<256xf32> to vector<256x1xf32>
    %cst_1 = arith.constant 1.000000e-24 : f32
    %4 = vector.broadcast %cst_1 : f32 to vector<256x1xf32>
    %5 = arith.maximumf %3, %4 : vector<256x1xf32>
    %6 = math.rsqrt %5 : vector<256x1xf32>
    %7 = vector.broadcast %6 : vector<256x1xf32> to vector<256x32xf32>
    %8 = arith.mulf %0, %7 : vector<256x32xf32>
    %9 = arith.truncf %8 : vector<256x32xf32> to vector<256x32xbf16>
    %c0_2 = arith.constant 0 : index
    %c0_3 = arith.constant 0 : index
    %10 = vector.load %arg1[%c0_2, %c0_3] : memref<256x32xbf16, #tpu.memory_space<vmem>>, vector<256x32xbf16>
    tpu.vector_store %arg1[%c0_2, %c0_3], %9 {strides = array<i32>} : memref<256x32xbf16, #tpu.memory_space<vmem>>, vector<256x32xbf16>,
    %11 = tpu.iota {dimensions = array<i32: 0>} : vector<128x1xi32>
    %c8_i32 = arith.constant 8 : i32
    %12 = vector.broadcast %c8_i32 : i32 to vector<128x1xi32>
    %13 = arith.cmpi slt, %11, %12 : vector<128x1xi32>
    %14 = vector.extract_strided_slice %8 {offsets = [0, 0], sizes = [128, 32], strides = [1, 1]} : vector<256x32xf32> to vector<128x32xf32>
    %15 = vector.extract_strided_slice %8 {offsets = [128, 0], sizes = [128, 32], strides = [1, 1]} : vector<256x32xf32> to vector<128x32xf32>
    %16 = arith.mulf %14, %15 : vector<128x32xf32>
    %cst_4 = arith.constant dense<0.000000e+00> : vector<128xf32>
    %17 = vector.multi_reduction <add>, %16, %cst_4 [1] : vector<128x32xf32> to vector<128xf32>
    %18 = vector.shape_cast %17 : vector<128xf32> to vector<128x1xf32>
    %cst_5 = arith.constant 1.000000e+00 : f32
    %19 = vector.broadcast %cst_5 : f32 to vector<128x1xf32>
    %20 = arith.subf %19, %18 : vector<128x1xf32>
    %cst_6 = arith.constant 0.000000e+00 : f32
    %21 = vector.broadcast %cst_6 : f32 to vector<128x1xf32>
    %22 = arith.cmpf ole, %20, %21 : vector<128x1xf32>
    %cst_7 = arith.constant 1.000000e-10 : f32
    %23 = vector.broadcast %cst_7 : f32 to vector<128x1xf32>
    %24 = arith.select %22, %23, %20 : vector<128x1xi1>, vector<128x1xf32>
    %cst_8 = arith.constant 2.000000e+00 : f32
    %25 = vector.broadcast %cst_8 : f32 to vector<128x1xf32>
    %26 = arith.mulf %25, %24 : vector<128x1xf32>
    %27 = math.sqrt %26 : vector<128x1xf32>
    %cst_9 = arith.constant 0.000000e+00 : f32
    %28 = vector.broadcast %cst_9 : f32 to vector<128x1xf32>
    %29 = arith.select %13, %27, %28 : vector<128x1xi1>, vector<128x1xf32>
    %30 = vector.shape_cast %29 : vector<128x1xf32> to vector<1x128x1xf32>
    %cst_10 = arith.constant dense<0.000000e+00> : vector<1xf32>
    %31 = vector.multi_reduction <add>, %30, %cst_10 [1, 2] : vector<1x128x1xf32> to vector<1xf32>
    %32 = vector.shape_cast %31 : vector<1xf32> to vector<1x1x1xf32>
    %33 = vector.extract %32[0, 0, 0] : f32 from vector<1x1x1xf32>
    %cst_11 = arith.constant 0.000000e+00 : f32
    %34 = arith.addf %cst_11, %33 : f32
    %cst_12 = arith.constant 1.600000e+01 : f32
    %35 = arith.divf %34, %cst_12 : f32
    %c0_13 = arith.constant 0 : index
    %c0_14 = arith.constant 0 : index
    %36 = memref.load %arg2[%c0_13, %c0_14] : memref<1x1xf32, #tpu.memory_space<smem>>
    memref.store %35, %arg2[%c0_13, %c0_14] : memref<1x1xf32, #tpu.memory_space<smem>>
    return
  }
}

</mosaic_0001>

<llo_original>
// kernel: tpu_custom_call.1
$region0: #{tpu_custom_call.1}
  #allocation0 [shape = 'u32[]', space=smem, size = 0x4, offset = 0x4, fixed_abs, tag = 'smem constant byte address 0x4 - core index']
  #allocation1 [shape = 'u32[144,128]{1,0:T(1,128)}', space=vmem, size = 0x12000, scoped, tag = 'internal scratch']
  %s0 = inlined_call_operand.vmem [shape: f32[256,32], index: 0, kind: input, shape index: {}]
  %s1 = inlined_call_operand.vmem [shape: bf16[256,32], index: 1, kind: output, shape index: {0}]
  %s2 = inlined_call_operand.hbm [shape: f32[1,1], index: 2, kind: output, shape index: {1}]
  %3 = xla_tuple %s1, %s2
  %s4 = sld [smem:[#allocation0]]
  $region22: #{tpu_custom_call.1} parent=0
    _
  %s6 = ssub.s32 1, %s4
  %s7 = scalar_select 0, %s6, %s4
  $region1: #{tpu_custom_call.1} parent=0
    #allocation2 [shape = 'u8[512]{0}', space=smem, size = 0x200, scoped, tag = 'output window, operand 1, single buffered']
    #allocation3 [shape = 's32[1]{0}', space=sflag, size = 0x4, scoped, tag = 'scoped memory for tpu_custom_call.1']
    %8 = vsyncpa [#allocation3], 0
    // Predicated region
    $region2: #{tpu_custom_call.1} parent=1 // pred_check
      _
    $region3: #{tpu_custom_call.1} parent=1 // pred_check_branch
      %10 = sbr.rel (0) target = $region5
    $region4: #{tpu_custom_call.1} parent=1 // pred_region
      _
    $region5: #{tpu_custom_call.1} parent=1 // pred_fallthru
      _
    %v11 = vld [vmem:[%s0] sm:$0xff]
    %v12 = vld [vmem:[%s0 + $0x8] sm:$0xff]
    %v13 = vld [vmem:[%s0 + $0x10] sm:$0xff]
    %v14 = vld [vmem:[%s0 + $0x18] sm:$0xff]
    %v15 = vld [vmem:[%s0 + $0x20] sm:$0xff]
    %v16 = vld [vmem:[%s0 + $0x28] sm:$0xff]
    %v17 = vld [vmem:[%s0 + $0x30] sm:$0xff]
    %v18 = vld [vmem:[%s0 + $0x38] sm:$0xff]
    %v19 = vld [vmem:[%s0 + $0x40] sm:$0xff]
    %v20 = vld [vmem:[%s0 + $0x48] sm:$0xff]
    %v21 = vld [vmem:[%s0 + $0x50] sm:$0xff]
    %v22 = vld [vmem:[%s0 + $0x58] sm:$0xff]
    %v23 = vld [vmem:[%s0 + $0x60] sm:$0xff]
    %v24 = vld [vmem:[%s0 + $0x68] sm:$0xff]
    %v25 = vld [vmem:[%s0 + $0x70] sm:$0xff]
    %v26 = vld [vmem:[%s0 + $0x78] sm:$0xff]
    %v27 = vld [vmem:[%s0 + $0x80] sm:$0xff]
    %v28 = vld [vmem:[%s0 + $0x88] sm:$0xff]
    %v29 = vld [vmem:[%s0 + $0x90] sm:$0xff]
    %v30 = vld [vmem:[%s0 + $0x98] sm:$0xff]
    %v31 = vld [vmem:[%s0 + $0xa0] sm:$0xff]
    %v32 = vld [vmem:[%s0 + $0xa8] sm:$0xff]
    %v33 = vld [vmem:[%s0 + $0xb0] sm:$0xff]
    %v34 = vld [vmem:[%s0 + $0xb8] sm:$0xff]
    %v35 = vld [vmem:[%s0 + $0xc0] sm:$0xff]
    %v36 = vld [vmem:[%s0 + $0xc8] sm:$0xff]
    %v37 = vld [vmem:[%s0 + $0xd0] sm:$0xff]
    %v38 = vld [vmem:[%s0 + $0xd8] sm:$0xff]
    %v39 = vld [vmem:[%s0 + $0xe0] sm:$0xff]
    %v40 = vld [vmem:[%s0 + $0xe8] sm:$0xff]
    %v41 = vld [vmem:[%s0 + $0xf0] sm:$0xff]
    %v42 = vld [vmem:[%s0 + $0xf8] sm:$0xff]
    %v43 = vmul.f32 %v11, %v11
    %v44 = vmul.f32 %v12, %v12
    %v45 = vmul.f32 %v13, %v13
    %v46 = vmul.f32 %v14, %v14
    %v47 = vmul.f32 %v15, %v15
    %v48 = vmul.f32 %v16, %v16
    %v49 = vmul.f32 %v17, %v17
    %v50 = vmul.f32 %v18, %v18
    %v51 = vmul.f32 %v19, %v19
    %v52 = vmul.f32 %v20, %v20
    %v53 = vmul.f32 %v21, %v21
    %v54 = vmul.f32 %v22, %v22
    %v55 = vmul.f32 %v23, %v23
    %v56 = vmul.f32 %v24, %v24
    %v57 = vmul.f32 %v25, %v25
    %v58 = vmul.f32 %v26, %v26
    %v59 = vmul.f32 %v27, %v27
    %v60 = vmul.f32 %v28, %v28
    %v61 = vmul.f32 %v29, %v29
    %v62 = vmul.f32 %v30, %v30
    %v63 = vmul.f32 %v31, %v31
    %v64 = vmul.f32 %v32, %v32
    %v65 = vmul.f32 %v33, %v33
    %v66 = vmul.f32 %v34, %v34
    %v67 = vmul.f32 %v35, %v35
    %v68 = vmul.f32 %v36, %v36
    %v69 = vmul.f32 %v37, %v37
    %v70 = vmul.f32 %v38, %v38
    %v71 = vmul.f32 %v39, %v39
    %v72 = vmul.f32 %v40, %v40
    %v73 = vmul.f32 %v41, %v41
    %v74 = vmul.f32 %v42, %v42
    %vm75 = vcmask 261120
    %v76 = vsel %vm75, %v43, 0.0
    %77 = vadd.xlane.f32.xlu0 %v76
    %v78 = vpop.xlane.xlu0 %77
    %v79 = vsel %vm75, %v44, 0.0
    %80 = vadd.xlane.f32.xlu0 %v79
    %v81 = vpop.xlane.xlu0 %80
    %v82 = vsel %vm75, %v45, 0.0
    %83 = vadd.xlane.f32.xlu0 %v82
    %v84 = vpop.xlane.xlu0 %83
    %v85 = vsel %vm75, %v46, 0.0
    %86 = vadd.xlane.f32.xlu0 %v85
    %v87 = vpop.xlane.xlu0 %86
    %v88 = vsel %vm75, %v47, 0.0
    %89 = vadd.xlane.f32.xlu0 %v88
    %v90 = vpop.xlane.xlu0 %89
    %v91 = vsel %vm75, %v48, 0.0
    %92 = vadd.xlane.f32.xlu0 %v91
    %v93 = vpop.xlane.xlu0 %92
    %v94 = vsel %vm75, %v49, 0.0
    %95 = vadd.xlane.f32.xlu0 %v94
    %v96 = vpop.xlane.xlu0 %95
    %v97 = vsel %vm75, %v50, 0.0
    %98 = vadd.xlane.f32.xlu0 %v97
    %v99 = vpop.xlane.xlu0 %98
    %v100 = vsel %vm75, %v51, 0.0
    %101 = vadd.xlane.f32.xlu0 %v100
    %v102 = vpop.xlane.xlu0 %101
    %v103 = vsel %vm75, %v52, 0.0
    %104 = vadd.xlane.f32.xlu0 %v103
    %v105 = vpop.xlane.xlu0 %104
    %v106 = vsel %vm75, %v53, 0.0
    %107 = vadd.xlane.f32.xlu0 %v106
    %v108 = vpop.xlane.xlu0 %107
    %v109 = vsel %vm75, %v54, 0.0
    %110 = vadd.xlane.f32.xlu0 %v109
    %v111 = vpop.xlane.xlu0 %110
    %v112 = vsel %vm75, %v55, 0.0
    %113 = vadd.xlane.f32.xlu0 %v112
    %v114 = vpop.xlane.xlu0 %113
    %v115 = vsel %vm75, %v56, 0.0
    %116 = vadd.xlane.f32.xlu0 %v115
    %v117 = vpop.xlane.xlu0 %116
    %v118 = vsel %vm75, %v57, 0.0
    %119 = vadd.xlane.f32.xlu0 %v118
    %v120 = vpop.xlane.xlu0 %119
    %v121 = vsel %vm75, %v58, 0.0
    %122 = vadd.xlane.f32.xlu0 %v121
    %v123 = vpop.xlane.xlu0 %122
    %v124 = vsel %vm75, %v59, 0.0
    %125 = vadd.xlane.f32.xlu0 %v124
    %v126 = vpop.xlane.xlu0 %125
    %v127 = vsel %vm75, %v60, 0.0
    %128 = vadd.xlane.f32.xlu0 %v127
    %v129 = vpop.xlane.xlu0 %128
    %v130 = vsel %vm75, %v61, 0.0
    %131 = vadd.xlane.f32.xlu0 %v130
    %v132 = vpop.xlane.xlu0 %131
    %v133 = vsel %vm75, %v62, 0.0
    %134 = vadd.xlane.f32.xlu0 %v133
    %v135 = vpop.xlane.xlu0 %134
    %v136 = vsel %vm75, %v63, 0.0
    %137 = vadd.xlane.f32.xlu0 %v136
    %v138 = vpop.xlane.xlu0 %137
    %v139 = vsel %vm75, %v64, 0.0
    %140 = vadd.xlane.f32.xlu0 %v139
    %v141 = vpop.xlane.xlu0 %140
    %v142 = vsel %vm75, %v65, 0.0
    %143 = vadd.xlane.f32.xlu0 %v142
    %v144 = vpop.xlane.xlu0 %143
    %v145 = vsel %vm75, %v66, 0.0
    %146 = vadd.xlane.f32.xlu0 %v145
    %v147 = vpop.xlane.xlu0 %146
    %v148 = vsel %vm75, %v67, 0.0
    %149 = vadd.xlane.f32.xlu0 %v148
    %v150 = vpop.xlane.xlu0 %149
    %v151 = vsel %vm75, %v68, 0.0
    %152 = vadd.xlane.f32.xlu0 %v151
    %v153 = vpop.xlane.xlu0 %152
    %v154 = vsel %vm75, %v69, 0.0
    %155 = vadd.xlane.f32.xlu0 %v154
    %v156 = vpop.xlane.xlu0 %155
    %v157 = vsel %vm75, %v70, 0.0
    %158 = vadd.xlane.f32.xlu0 %v157
    %v159 = vpop.xlane.xlu0 %158
    %v160 = vsel %vm75, %v71, 0.0
    %161 = vadd.xlane.f32.xlu0 %v160
    %v162 = vpop.xlane.xlu0 %161
    %v163 = vsel %vm75, %v72, 0.0
    %164 = vadd.xlane.f32.xlu0 %v163
    %v165 = vpop.xlane.xlu0 %164
    %v166 = vsel %vm75, %v73, 0.0
    %167 = vadd.xlane.f32.xlu0 %v166
    %v168 = vpop.xlane.xlu0 %167
    %v169 = vsel %vm75, %v74, 0.0
    %170 = vadd.xlane.f32.xlu0 %v169
    %v171 = vpop.xlane.xlu0 %170
    %v172 = vmax.f32 %v78, 1e-24
    %v173 = vmax.f32 %v81, 1e-24
    %v174 = vmax.f32 %v84, 1e-24
    %v175 = vmax.f32 %v87, 1e-24
    %v176 = vmax.f32 %v90, 1e-24
    %v177 = vmax.f32 %v93, 1e-24
    %v178 = vmax.f32 %v96, 1e-24
    %v179 = vmax.f32 %v99, 1e-24
    %v180 = vmax.f32 %v102, 1e-24
    %v181 = vmax.f32 %v105, 1e-24
    %v182 = vmax.f32 %v108, 1e-24
    %v183 = vmax.f32 %v111, 1e-24
    %v184 = vmax.f32 %v114, 1e-24
    %v185 = vmax.f32 %v117, 1e-24
    %v186 = vmax.f32 %v120, 1e-24
    %v187 = vmax.f32 %v123, 1e-24
    %v188 = vmax.f32 %v126, 1e-24
    %v189 = vmax.f32 %v129, 1e-24
    %v190 = vmax.f32 %v132, 1e-24
    %v191 = vmax.f32 %v135, 1e-24
    %v192 = vmax.f32 %v138, 1e-24
    %v193 = vmax.f32 %v141, 1e-24
    %v194 = vmax.f32 %v144, 1e-24
    %v195 = vmax.f32 %v147, 1e-24
    %v196 = vmax.f32 %v150, 1e-24
    %v197 = vmax.f32 %v153, 1e-24
    %v198 = vmax.f32 %v156, 1e-24
    %v199 = vmax.f32 %v159, 1e-24
    %v200 = vmax.f32 %v162, 1e-24
    %v201 = vmax.f32 %v165, 1e-24
    %v202 = vmax.f32 %v168, 1e-24
    %v203 = vmax.f32 %v171, 1e-24
    %v204 = vrsqrt.pop %v172
    %v205 = vrsqrt.pop %v173
    %v206 = vrsqrt.pop %v174
    %v207 = vrsqrt.pop %v175
    %v208 = vrsqrt.pop %v176
    %v209 = vrsqrt.pop %v177
    %v210 = vrsqrt.pop %v178
    %v211 = vrsqrt.pop %v179
    %v212 = vrsqrt.pop %v180
    %v213 = vrsqrt.pop %v181
    %v214 = vrsqrt.pop %v182
    %v215 = vrsqrt.pop %v183
    %v216 = vrsqrt.pop %v184
    %v217 = vrsqrt.pop %v185
    %v218 = vrsqrt.pop %v186
    %v219 = vrsqrt.pop %v187
    %v220 = vrsqrt.pop %v188
    %v221 = vrsqrt.pop %v189
    %v222 = vrsqrt.pop %v190
    %v223 = vrsqrt.pop %v191
    %v224 = vrsqrt.pop %v192
    %v225 = vrsqrt.pop %v193
    %v226 = vrsqrt.pop %v194
    %v227 = vrsqrt.pop %v195
    %v228 = vrsqrt.pop %v196
    %v229 = vrsqrt.pop %v197
    %v230 = vrsqrt.pop %v198
    %v231 = vrsqrt.pop %v199
    %v232 = vrsqrt.pop %v200
    %v233 = vrsqrt.pop %v201
    %v234 = vrsqrt.pop %v202
    %v235 = vrsqrt.pop %v203
    %v236 = vmul.f32 %v11, %v204
    %v237 = vmul.f32 %v12, %v205
    %v238 = vmul.f32 %v13, %v206
    %v239 = vmul.f32 %v14, %v207
    %v240 = vmul.f32 %v15, %v208
    %v241 = vmul.f32 %v16, %v209
    %v242 = vmul.f32 %v17, %v210
    %v243 = vmul.f32 %v18, %v211
    %v244 = vmul.f32 %v19, %v212
    %v245 = vmul.f32 %v20, %v213
    %v246 = vmul.f32 %v21, %v214
    %v247 = vmul.f32 %v22, %v215
    %v248 = vmul.f32 %v23, %v216
    %v249 = vmul.f32 %v24, %v217
    %v250 = vmul.f32 %v25, %v218
    %v251 = vmul.f32 %v26, %v219
    %v252 = vmul.f32 %v27, %v220
    %v253 = vmul.f32 %v28, %v221
    %v254 = vmul.f32 %v29, %v222
    %v255 = vmul.f32 %v30, %v223
    %v256 = vmul.f32 %v31, %v224
    %v257 = vmul.f32 %v32, %v225
    %v258 = vmul.f32 %v33, %v226
    %v259 = vmul.f32 %v34, %v227
    %v260 = vmul.f32 %v35, %v228
    %v261 = vmul.f32 %v36, %v229
    %v262 = vmul.f32 %v37, %v230
    %v263 = vmul.f32 %v38, %v231
    %v264 = vmul.f32 %v39, %v232
    %v265 = vmul.f32 %v40, %v233
    %v266 = vmul.f32 %v41, %v234
    %v267 = vmul.f32 %v42, %v235
    %v268 = vpack.c.bf16 %v237, %v236
    %v269 = vpack.c.bf16 %v239, %v238
    %v270 = vpack.c.bf16 %v241, %v240
    %v271 = vpack.c.bf16 %v243, %v242
    %v272 = vpack.c.bf16 %v245, %v244
    %v273 = vpack.c.bf16 %v247, %v246
    %v274 = vpack.c.bf16 %v249, %v248
    %v275 = vpack.c.bf16 %v251, %v250
    %v276 = vpack.c.bf16 %v253, %v252
    %v277 = vpack.c.bf16 %v255, %v254
    %v278 = vpack.c.bf16 %v257, %v256
    %v279 = vpack.c.bf16 %v259, %v258
    %v280 = vpack.c.bf16 %v261, %v260
    %v281 = vpack.c.bf16 %v263, %v262
    %v282 = vpack.c.bf16 %v265, %v264
    %v283 = vpack.c.bf16 %v267, %v266
    %v300 = vunpack.c.l.b16 %v268
    %v301 = vunpack.c.h.b16 %v268
    %v302 = vunpack.c.l.b16 %v269
    %v303 = vunpack.c.h.b16 %v269
    %v304 = vunpack.c.l.b16 %v270
    %v305 = vunpack.c.h.b16 %v270
    %v306 = vunpack.c.l.b16 %v271
    %v307 = vunpack.c.h.b16 %v271
    %v308 = vunpack.c.l.b16 %v272
    %v309 = vunpack.c.h.b16 %v272
    %v310 = vunpack.c.l.b16 %v273
    %v311 = vunpack.c.h.b16 %v273
    %v312 = vunpack.c.l.b16 %v274
    %v313 = vunpack.c.h.b16 %v274
    %v314 = vunpack.c.l.b16 %v275
    %v315 = vunpack.c.h.b16 %v275
    %v316 = vunpack.c.l.b16 %v276
    %v317 = vunpack.c.h.b16 %v276
    %v318 = vunpack.c.l.b16 %v277
    %v319 = vunpack.c.h.b16 %v277
    %v320 = vunpack.c.l.b16 %v278
    %v321 = vunpack.c.h.b16 %v278
    %v322 = vunpack.c.l.b16 %v279
    %v323 = vunpack.c.h.b16 %v279
    %v324 = vunpack.c.l.b16 %v280
    %v325 = vunpack.c.h.b16 %v280
    %v326 = vunpack.c.l.b16 %v281
    %v327 = vunpack.c.h.b16 %v281
    %v328 = vunpack.c.l.b16 %v282
    %v329 = vunpack.c.h.b16 %v282
    %v330 = vunpack.c.l.b16 %v283
    %v331 = vunpack.c.h.b16 %v283
    %v332 = vpack.c.b16 %v300, %v300
    %v333 = vpack.c.b16 %v301, %v301
    %v334 = vpack.c.b16 %v302, %v302
    %v335 = vpack.c.b16 %v303, %v303
    %v336 = vpack.c.b16 %v304, %v304
    %v337 = vpack.c.b16 %v305, %v305
    %v338 = vpack.c.b16 %v306, %v306
    %v339 = vpack.c.b16 %v307, %v307
    %v340 = vpack.c.b16 %v308, %v308
    %v341 = vpack.c.b16 %v309, %v309
    %v342 = vpack.c.b16 %v310, %v310
    %v343 = vpack.c.b16 %v311, %v311
    %v344 = vpack.c.b16 %v312, %v312
    %v345 = vpack.c.b16 %v313, %v313
    %v346 = vpack.c.b16 %v314, %v314
    %v347 = vpack.c.b16 %v315, %v315
    %v348 = vpack.c.b16 %v316, %v316
    %v349 = vpack.c.b16 %v317, %v317
    %v350 = vpack.c.b16 %v318, %v318
    %v351 = vpack.c.b16 %v319, %v319
    %v352 = vpack.c.b16 %v320, %v320
    %v353 = vpack.c.b16 %v321, %v321
    %v354 = vpack.c.b16 %v322, %v322
    %v355 = vpack.c.b16 %v323, %v323
    %v356 = vpack.c.b16 %v324, %v324
    %v357 = vpack.c.b16 %v325, %v325
    %v358 = vpack.c.b16 %v326, %v326
    %v359 = vpack.c.b16 %v327, %v327
    %v360 = vpack.c.b16 %v328, %v328
    %v361 = vpack.c.b16 %v329, %v329
    %v362 = vpack.c.b16 %v330, %v330
    %v363 = vpack.c.b16 %v331, %v331
    %vm396 = vcmask 257024
    %397 = vst.msk [vmem:[%s1] sm:$0xf] %vm396, %v332
    %398 = vst.msk [vmem:[%s1 + $0x4] sm:$0xf] %vm396, %v333
    %399 = vst.msk [vmem:[%s1 + $0x8] sm:$0xf] %vm396, %v334
    %400 = vst.msk [vmem:[%s1 + $0xc] sm:$0xf] %vm396, %v335
    %401 = vst.msk [vmem:[%s1 + $0x10] sm:$0xf] %vm396, %v336
    %402 = vst.msk [vmem:[%s1 + $0x14] sm:$0xf] %vm396, %v337
    %403 = vst.msk [vmem:[%s1 + $0x18] sm:$0xf] %vm396, %v338
    %404 = vst.msk [vmem:[%s1 + $0x1c] sm:$0xf] %vm396, %v339
    %405 = vst.msk [vmem:[%s1 + $0x20] sm:$0xf] %vm396, %v340
    %406 = vst.msk [vmem:[%s1 + $0x24] sm:$0xf] %vm396, %v341
    %407 = vst.msk [vmem:[%s1 + $0x28] sm:$0xf] %vm396, %v342
    %408 = vst.msk [vmem:[%s1 + $0x2c] sm:$0xf] %vm396, %v343
    %409 = vst.msk [vmem:[%s1 + $0x30] sm:$0xf] %vm396, %v344
    %410 = vst.msk [vmem:[%s1 + $0x34] sm:$0xf] %vm396, %v345
    %411 = vst.msk [vmem:[%s1 + $0x38] sm:$0xf] %vm396, %v346
    %412 = vst.msk [vmem:[%s1 + $0x3c] sm:$0xf] %vm396, %v347
    %413 = vst.msk [vmem:[%s1 + $0x40] sm:$0xf] %vm396, %v348
    %414 = vst.msk [vmem:[%s1 + $0x44] sm:$0xf] %vm396, %v349
    %415 = vst.msk [vmem:[%s1 + $0x48] sm:$0xf] %vm396, %v350
    %416 = vst.msk [vmem:[%s1 + $0x4c] sm:$0xf] %vm396, %v351
    %417 = vst.msk [vmem:[%s1 + $0x50] sm:$0xf] %vm396, %v352
    %418 = vst.msk [vmem:[%s1 + $0x54] sm:$0xf] %vm396, %v353
    %419 = vst.msk [vmem:[%s1 + $0x58] sm:$0xf] %vm396, %v354
    %420 = vst.msk [vmem:[%s1 + $0x5c] sm:$0xf] %vm396, %v355
    %421 = vst.msk [vmem:[%s1 + $0x60] sm:$0xf] %vm396, %v356
    %422 = vst.msk [vmem:[%s1 + $0x64] sm:$0xf] %vm396, %v357
    %423 = vst.msk [vmem:[%s1 + $0x68] sm:$0xf] %vm396, %v358
    %424 = vst.msk [vmem:[%s1 + $0x6c] sm:$0xf] %vm396, %v359
    %425 = vst.msk [vmem:[%s1 + $0x70] sm:$0xf] %vm396, %v360
    %426 = vst.msk [vmem:[%s1 + $0x74] sm:$0xf] %vm396, %v361
    %427 = vst.msk [vmem:[%s1 + $0x78] sm:$0xf] %vm396, %v362
    %428 = vst.msk [vmem:[%s1 + $0x7c] sm:$0xf] %vm396, %v363
    %v429 = vlaneseq
    %v430 = vshrl.u32 %v429, 7
    %v431 = vadd.s32 %v430, 8
    %v432 = vadd.s32 %v430, 16
    %v433 = vadd.s32 %v430, 24
    %v434 = vadd.s32 %v430, 32
    %v435 = vadd.s32 %v430, 40
    %v436 = vadd.s32 %v430, 48
    %v437 = vadd.s32 %v430, 56
    %v438 = vadd.s32 %v430, 64
    %v439 = vadd.s32 %v430, 72
    %v440 = vadd.s32 %v430, 80
    %v441 = vadd.s32 %v430, 88
    %v442 = vadd.s32 %v430, 96
    %v443 = vadd.s32 %v430, 104
    %v444 = vadd.s32 %v430, 112
    %v445 = vadd.s32 %v430, 120
    %vm446 = vcmp.lt.s32.totalorder %v430, 8
    %vm447 = vcmp.lt.s32.totalorder %v431, 8
    %vm448 = vcmp.lt.s32.totalorder %v432, 8
    %vm449 = vcmp.lt.s32.totalorder %v433, 8
    %vm450 = vcmp.lt.s32.totalorder %v434, 8
    %vm451 = vcmp.lt.s32.totalorder %v435, 8
    %vm452 = vcmp.lt.s32.totalorder %v436, 8
    %vm453 = vcmp.lt.s32.totalorder %v437, 8
    %vm454 = vcmp.lt.s32.totalorder %v438, 8
    %vm455 = vcmp.lt.s32.totalorder %v439, 8
    %vm456 = vcmp.lt.s32.totalorder %v440, 8
    %vm457 = vcmp.lt.s32.totalorder %v441, 8
    %vm458 = vcmp.lt.s32.totalorder %v442, 8
    %vm459 = vcmp.lt.s32.totalorder %v443, 8
    %vm460 = vcmp.lt.s32.totalorder %v444, 8
    %vm461 = vcmp.lt.s32.totalorder %v445, 8
    %v462 = vmul.f32 %v236, %v252
    %v463 = vmul.f32 %v237, %v253
    %v464 = vmul.f32 %v238, %v254
    %v465 = vmul.f32 %v239, %v255
    %v466 = vmul.f32 %v240, %v256
    %v467 = vmul.f32 %v241, %v257
    %v468 = vmul.f32 %v242, %v258
    %v469 = vmul.f32 %v243, %v259
    %v470 = vmul.f32 %v244, %v260
    %v471 = vmul.f32 %v245, %v261
    %v472 = vmul.f32 %v246, %v262
    %v473 = vmul.f32 %v247, %v263
    %v474 = vmul.f32 %v248, %v264
    %v475 = vmul.f32 %v249, %v265
    %v476 = vmul.f32 %v250, %v266
    %v477 = vmul.f32 %v251, %v267
    %v478 = vsel %vm75, %v462, 0.0
    %479 = vadd.xlane.f32.xlu0 %v478
    %v480 = vpop.xlane.xlu0 %479
    %v481 = vsel %vm75, %v463, 0.0
    %482 = vadd.xlane.f32.xlu0 %v481
    %v483 = vpop.xlane.xlu0 %482
    %v484 = vsel %vm75, %v464, 0.0
    %485 = vadd.xlane.f32.xlu0 %v484
    %v486 = vpop.xlane.xlu0 %485
    %v487 = vsel %vm75, %v465, 0.0
    %488 = vadd.xlane.f32.xlu0 %v487
    %v489 = vpop.xlane.xlu0 %488
    %v490 = vsel %vm75, %v466, 0.0
    %491 = vadd.xlane.f32.xlu0 %v490
    %v492 = vpop.xlane.xlu0 %491
    %v493 = vsel %vm75, %v467, 0.0
    %494 = vadd.xlane.f32.xlu0 %v493
    %v495 = vpop.xlane.xlu0 %494
    %v496 = vsel %vm75, %v468, 0.0
    %497 = vadd.xlane.f32.xlu0 %v496
    %v498 = vpop.xlane.xlu0 %497
    %v499 = vsel %vm75, %v469, 0.0
    %500 = vadd.xlane.f32.xlu0 %v499
    %v501 = vpop.xlane.xlu0 %500
    %v502 = vsel %vm75, %v470, 0.0
    %503 = vadd.xlane.f32.xlu0 %v502
    %v504 = vpop.xlane.xlu0 %503
    %v505 = vsel %vm75, %v471, 0.0
    %506 = vadd.xlane.f32.xlu0 %v505
    %v507 = vpop.xlane.xlu0 %506
    %v508 = vsel %vm75, %v472, 0.0
    %509 = vadd.xlane.f32.xlu0 %v508
    %v510 = vpop.xlane.xlu0 %509
    %v511 = vsel %vm75, %v473, 0.0
    %512 = vadd.xlane.f32.xlu0 %v511
    %v513 = vpop.xlane.xlu0 %512
    %v514 = vsel %vm75, %v474, 0.0
    %515 = vadd.xlane.f32.xlu0 %v514
    %v516 = vpop.xlane.xlu0 %515
    %v517 = vsel %vm75, %v475, 0.0
    %518 = vadd.xlane.f32.xlu0 %v517
    %v519 = vpop.xlane.xlu0 %518
    %v520 = vsel %vm75, %v476, 0.0
    %521 = vadd.xlane.f32.xlu0 %v520
    %v522 = vpop.xlane.xlu0 %521
    %v523 = vsel %vm75, %v477, 0.0
    %524 = vadd.xlane.f32.xlu0 %v523
    %v525 = vpop.xlane.xlu0 %524
    %v526 = vsub.f32 1.0, %v480
    %v527 = vsub.f32 1.0, %v483
    %v528 = vsub.f32 1.0, %v486
    %v529 = vsub.f32 1.0, %v489
    %v530 = vsub.f32 1.0, %v492
    %v531 = vsub.f32 1.0, %v495
    %v532 = vsub.f32 1.0, %v498
    %v533 = vsub.f32 1.0, %v501
    %v534 = vsub.f32 1.0, %v504
    %v535 = vsub.f32 1.0, %v507
    %v536 = vsub.f32 1.0, %v510
    %v537 = vsub.f32 1.0, %v513
    %v538 = vsub.f32 1.0, %v516
    %v539 = vsub.f32 1.0, %v519
    %v540 = vsub.f32 1.0, %v522
    %v541 = vsub.f32 1.0, %v525
    %vm542 = vcmp.le.f32.partialorder %v526, 0.0
    %vm543 = vcmp.le.f32.partialorder %v527, 0.0
    %vm544 = vcmp.le.f32.partialorder %v528, 0.0
    %vm545 = vcmp.le.f32.partialorder %v529, 0.0
    %vm546 = vcmp.le.f32.partialorder %v530, 0.0
    %vm547 = vcmp.le.f32.partialorder %v531, 0.0
    %vm548 = vcmp.le.f32.partialorder %v532, 0.0
    %vm549 = vcmp.le.f32.partialorder %v533, 0.0
    %vm550 = vcmp.le.f32.partialorder %v534, 0.0
    %vm551 = vcmp.le.f32.partialorder %v535, 0.0
    %vm552 = vcmp.le.f32.partialorder %v536, 0.0
    %vm553 = vcmp.le.f32.partialorder %v537, 0.0
    %vm554 = vcmp.le.f32.partialorder %v538, 0.0
    %vm555 = vcmp.le.f32.partialorder %v539, 0.0
    %vm556 = vcmp.le.f32.partialorder %v540, 0.0
    %vm557 = vcmp.le.f32.partialorder %v541, 0.0
    %v558 = vsel %vm542, 1e-10, %v526
    %v559 = vsel %vm543, 1e-10, %v527
    %v560 = vsel %vm544, 1e-10, %v528
    %v561 = vsel %vm545, 1e-10, %v529
    %v562 = vsel %vm546, 1e-10, %v530
    %v563 = vsel %vm547, 1e-10, %v531
    %v564 = vsel %vm548, 1e-10, %v532
    %v565 = vsel %vm549, 1e-10, %v533
    %v566 = vsel %vm550, 1e-10, %v534
    %v567 = vsel %vm551, 1e-10, %v535
    %v568 = vsel %vm552, 1e-10, %v536
    %v569 = vsel %vm553, 1e-10, %v537
    %v570 = vsel %vm554, 1e-10, %v538
    %v571 = vsel %vm555, 1e-10, %v539
    %v572 = vsel %vm556, 1e-10, %v540
    %v573 = vsel %vm557, 1e-10, %v541
    %v574 = vmul.f32 %v558, 2.0
    %v575 = vmul.f32 %v559, 2.0
    %v576 = vmul.f32 %v560, 2.0
    %v577 = vmul.f32 %v561, 2.0
    %v578 = vmul.f32 %v562, 2.0
    %v579 = vmul.f32 %v563, 2.0
    %v580 = vmul.f32 %v564, 2.0
    %v581 = vmul.f32 %v565, 2.0
    %v582 = vmul.f32 %v566, 2.0
    %v583 = vmul.f32 %v567, 2.0
    %v584 = vmul.f32 %v568, 2.0
    %v585 = vmul.f32 %v569, 2.0
    %v586 = vmul.f32 %v570, 2.0
    %v587 = vmul.f32 %v571, 2.0
    %v588 = vmul.f32 %v572, 2.0
    %v589 = vmul.f32 %v573, 2.0
    %v590 = vrsqrt.pop %v574
    %v591 = vmul.f32 %v574, %v590
    %vm592 = vcmp.eq.f32.partialorder %v574, inf
    %v593 = vsel %vm592, %v574, %v591
    %vm594 = vcmp.eq.f32.partialorder %v574, 0.0
    %v595 = vand.u32 %v574, 2147483648
    %v596 = vsel %vm594, %v595, %v593
    %v597 = vrsqrt.pop %v575
    %v598 = vmul.f32 %v575, %v597
    %vm599 = vcmp.eq.f32.partialorder %v575, inf
    %v600 = vsel %vm599, %v575, %v598
    %vm601 = vcmp.eq.f32.partialorder %v575, 0.0
    %v602 = vand.u32 %v575, 2147483648
    %v603 = vsel %vm601, %v602, %v600
    %v604 = vrsqrt.pop %v576
    %v605 = vmul.f32 %v576, %v604
    %vm606 = vcmp.eq.f32.partialorder %v576, inf
    %v607 = vsel %vm606, %v576, %v605
    %vm608 = vcmp.eq.f32.partialorder %v576, 0.0
    %v609 = vand.u32 %v576, 2147483648
    %v610 = vsel %vm608, %v609, %v607
    %v611 = vrsqrt.pop %v577
    %v612 = vmul.f32 %v577, %v611
    %vm613 = vcmp.eq.f32.partialorder %v577, inf
    %v614 = vsel %vm613, %v577, %v612
    %vm615 = vcmp.eq.f32.partialorder %v577, 0.0
    %v616 = vand.u32 %v577, 2147483648
    %v617 = vsel %vm615, %v616, %v614
    %v618 = vrsqrt.pop %v578
    %v619 = vmul.f32 %v578, %v618
    %vm620 = vcmp.eq.f32.partialorder %v578, inf
    %v621 = vsel %vm620, %v578, %v619
    %vm622 = vcmp.eq.f32.partialorder %v578, 0.0
    %v623 = vand.u32 %v578, 2147483648
    %v624 = vsel %vm622, %v623, %v621
    %v625 = vrsqrt.pop %v579
    %v626 = vmul.f32 %v579, %v625
    %vm627 = vcmp.eq.f32.partialorder %v579, inf
    %v628 = vsel %vm627, %v579, %v626
    %vm629 = vcmp.eq.f32.partialorder %v579, 0.0
    %v630 = vand.u32 %v579, 2147483648
    %v631 = vsel %vm629, %v630, %v628
    %v632 = vrsqrt.pop %v580
    %v633 = vmul.f32 %v580, %v632
    %vm634 = vcmp.eq.f32.partialorder %v580, inf
    %v635 = vsel %vm634, %v580, %v633
    %vm636 = vcmp.eq.f32.partialorder %v580, 0.0
    %v637 = vand.u32 %v580, 2147483648
    %v638 = vsel %vm636, %v637, %v635
    %v639 = vrsqrt.pop %v581
    %v640 = vmul.f32 %v581, %v639
    %vm641 = vcmp.eq.f32.partialorder %v581, inf
    %v642 = vsel %vm641, %v581, %v640
    %vm643 = vcmp.eq.f32.partialorder %v581, 0.0
    %v644 = vand.u32 %v581, 2147483648
    %v645 = vsel %vm643, %v644, %v642
    %v646 = vrsqrt.pop %v582
    %v647 = vmul.f32 %v582, %v646
    %vm648 = vcmp.eq.f32.partialorder %v582, inf
    %v649 = vsel %vm648, %v582, %v647
    %vm650 = vcmp.eq.f32.partialorder %v582, 0.0
    %v651 = vand.u32 %v582, 2147483648
    %v652 = vsel %vm650, %v651, %v649
    %v653 = vrsqrt.pop %v583
    %v654 = vmul.f32 %v583, %v653
    %vm655 = vcmp.eq.f32.partialorder %v583, inf
    %v656 = vsel %vm655, %v583, %v654
    %vm657 = vcmp.eq.f32.partialorder %v583, 0.0
    %v658 = vand.u32 %v583, 2147483648
    %v659 = vsel %vm657, %v658, %v656
    %v660 = vrsqrt.pop %v584
    %v661 = vmul.f32 %v584, %v660
    %vm662 = vcmp.eq.f32.partialorder %v584, inf
    %v663 = vsel %vm662, %v584, %v661
    %vm664 = vcmp.eq.f32.partialorder %v584, 0.0
    %v665 = vand.u32 %v584, 2147483648
    %v666 = vsel %vm664, %v665, %v663
    %v667 = vrsqrt.pop %v585
    %v668 = vmul.f32 %v585, %v667
    %vm669 = vcmp.eq.f32.partialorder %v585, inf
    %v670 = vsel %vm669, %v585, %v668
    %vm671 = vcmp.eq.f32.partialorder %v585, 0.0
    %v672 = vand.u32 %v585, 2147483648
    %v673 = vsel %vm671, %v672, %v670
    %v674 = vrsqrt.pop %v586
    %v675 = vmul.f32 %v586, %v674
    %vm676 = vcmp.eq.f32.partialorder %v586, inf
    %v677 = vsel %vm676, %v586, %v675
    %vm678 = vcmp.eq.f32.partialorder %v586, 0.0
    %v679 = vand.u32 %v586, 2147483648
    %v680 = vsel %vm678, %v679, %v677
    %v681 = vrsqrt.pop %v587
    %v682 = vmul.f32 %v587, %v681
    %vm683 = vcmp.eq.f32.partialorder %v587, inf
    %v684 = vsel %vm683, %v587, %v682
    %vm685 = vcmp.eq.f32.partialorder %v587, 0.0
    %v686 = vand.u32 %v587, 2147483648
    %v687 = vsel %vm685, %v686, %v684
    %v688 = vrsqrt.pop %v588
    %v689 = vmul.f32 %v588, %v688
    %vm690 = vcmp.eq.f32.partialorder %v588, inf
    %v691 = vsel %vm690, %v588, %v689
    %vm692 = vcmp.eq.f32.partialorder %v588, 0.0
    %v693 = vand.u32 %v588, 2147483648
    %v694 = vsel %vm692, %v693, %v691
    %v695 = vrsqrt.pop %v589
    %v696 = vmul.f32 %v589, %v695
    %vm697 = vcmp.eq.f32.partialorder %v589, inf
    %v698 = vsel %vm697, %v589, %v696
    %vm699 = vcmp.eq.f32.partialorder %v589, 0.0
    %v700 = vand.u32 %v589, 2147483648
    %v701 = vsel %vm699, %v700, %v698
    %v702 = vsel %vm446, %v596, 0.0
    %v703 = vsel %vm447, %v603, 0.0
    %v704 = vsel %vm448, %v610, 0.0
    %v705 = vsel %vm449, %v617, 0.0
    %v706 = vsel %vm450, %v624, 0.0
    %v707 = vsel %vm451, %v631, 0.0
    %v708 = vsel %vm452, %v638, 0.0
    %v709 = vsel %vm453, %v645, 0.0
    %v710 = vsel %vm454, %v652, 0.0
    %v711 = vsel %vm455, %v659, 0.0
    %v712 = vsel %vm456, %v666, 0.0
    %v713 = vsel %vm457, %v673, 0.0
    %v714 = vsel %vm458, %v680, 0.0
    %v715 = vsel %vm459, %v687, 0.0
    %v716 = vsel %vm460, %v694, 0.0
    %v717 = vsel %vm461, %v701, 0.0
    %vm718 = vcmask 7168
    %v719 = vsel %vm718, %v702, 0.0
    %v720 = vsel %vm718, %v703, 0.0
    %v721 = vadd.f32 %v719, %v720
    %v722 = vsel %vm718, %v704, 0.0
    %v723 = vadd.f32 %v721, %v722
    %v724 = vsel %vm718, %v705, 0.0
    %v725 = vadd.f32 %v723, %v724
    %v726 = vsel %vm718, %v706, 0.0
    %v727 = vadd.f32 %v725, %v726
    %v728 = vsel %vm718, %v707, 0.0
    %v729 = vadd.f32 %v727, %v728
    %v730 = vsel %vm718, %v708, 0.0
    %v731 = vadd.f32 %v729, %v730
    %v732 = vsel %vm718, %v709, 0.0
    %v733 = vadd.f32 %v731, %v732
    %v734 = vsel %vm718, %v710, 0.0
    %v735 = vadd.f32 %v733, %v734
    %v736 = vsel %vm718, %v711, 0.0
    %v737 = vadd.f32 %v735, %v736
    %v738 = vsel %vm718, %v712, 0.0
    %v739 = vadd.f32 %v737, %v738
    %v740 = vsel %vm718, %v713, 0.0
    %v741 = vadd.f32 %v739, %v740
    %v742 = vsel %vm718, %v714, 0.0
    %v743 = vadd.f32 %v741, %v742
    %v744 = vsel %vm718, %v715, 0.0
    %v745 = vadd.f32 %v743, %v744
    %v746 = vsel %vm718, %v716, 0.0
    %v747 = vadd.f32 %v745, %v746
    %v748 = vsel %vm718, %v717, 0.0
    %v749 = vadd.f32 %v747, %v748
    %750 = vadd.xlane.f32.xlu0 %v749
    %v751 = vpop.xlane.xlu0 %750
    %v752 = vrot.slane %v751, 4
    %v753 = vadd.f32 %v751, %v752
    %v754 = vrot.slane %v753, 2
    %v755 = vadd.f32 %v753, %v754
    %v756 = vrot.slane %v755, 1
    %v757 = vadd.f32 %v755, %v756
    %s758 = vtos %v757
    %s759 = sadd.f32 %s758, 0.0
    %v760 = vrcp.pop 16.0
    %s761 = vtos %v760
    %s762 = smul.f32 %s759, %s761
    %s763 = scalar_lea.smem [#allocation2], 0
    %764 = sst [smem:[%s763]] %s762
    // Predicated region
    $region6: #{tpu_custom_call.1} parent=1 // pred_check
      _
    $region7: #{tpu_custom_call.1} parent=1 // pred_check_branch
      %766 = sbr.rel (0) target = $region9
    $region8: #{tpu_custom_call.1} parent=1 // pred_region
      _
    $region9: #{tpu_custom_call.1} parent=1 // pred_fallthru
      _
    // Predicated region
    $region10: #{tpu_custom_call.1} parent=1 // pred_check
      _
    $region11: #{tpu_custom_call.1} parent=1 // pred_check_branch
      %768 = sbr.rel (0) target = $region13
    $region12: #{tpu_custom_call.1} parent=1 // pred_region
      %s770 = ssub.s32 16, 16
      %771 = vsyncadd [#allocation3], %s770
      %774 = dma.smem_to_hbm [#allocation2], 16, %s2, [#allocation3]
    $region13: #{tpu_custom_call.1} parent=1 // pred_fallthru
      _
    // Predicated region
    $region14: #{tpu_custom_call.1} parent=1 // pred_check
      _
    $region15: #{tpu_custom_call.1} parent=1 // pred_check_branch
      %776 = sbr.rel (0) target = $region17
    $region16: #{tpu_custom_call.1} parent=1 // pred_region
      _
    $region17: #{tpu_custom_call.1} parent=1 // pred_fallthru
      _
    // Predicated region
    $region18: #{tpu_custom_call.1} parent=1 // pred_check
      _
    $region19: #{tpu_custom_call.1} parent=1 // pred_check_branch
      %778 = sbr.rel (0) target = $region21
    $region20: #{tpu_custom_call.1} parent=1 // pred_region
      %779 = dma.done [#allocation3], 16
    $region21: #{tpu_custom_call.1} parent=1 // pred_fallthru
      _
    %780 = sfence
    %781 = vsyncpa [#allocation3], 1

</llo_original>
